<compile_context>
chip_gen: v7x
topology: tpu7x:2x2x1
jax: 0.10.0
libtpu: 0.0.40
codegen_flags: <defaults>
</compile_context>

<pallas_src>
import functools

import jax
import jax.numpy as jnp
from jax.experimental import pallas as pl
from jax.experimental.pallas import tpu as pltpu

LANE = 128
_MIB = 1024 * 1024
_MAX_ADJ_TILE_BYTES = 4 * _MIB        # per adj tile buffer (x2 for double buffering)
_RESIDENT_T_BUDGET = 16 * _MIB        # budget for a (x2-buffered) resident t copy


def _round_up(v, m):
    return (v + m - 1) // m * m


def _pick_tile_m(n_pad):
    for c in (512, 256, 128):
        if n_pad % c == 0:
            return c
    return LANE


def _pick_tile_k(n_pad, tile_m, itemsize):
    for c in (2048, 1024, 512, 256, 128):
        if n_pad % c == 0 and tile_m * c * itemsize <= _MAX_ADJ_TILE_BYTES:
            return c
    return LANE


def _vmem_limit(est_bytes):
    # Raise the scoped-VMEM limit (v5e default is only 16 MiB) while staying
    # well under v7x's 64 MiB/TC physical VMEM.
    return int(min(max(2 * est_bytes, 32 * _MIB), 48 * _MIB))


def _pad_cast(a, shape, dtype):
    """Zero-pad `a` to `shape` and cast to `dtype`; no-op if already there."""
    dtype = jnp.dtype(dtype)
    if a.shape == shape and a.dtype == dtype:
        return a
    if a.shape == shape:
        return a.astype(dtype)
    out = jnp.zeros(shape, dtype)
    return out.at[: a.shape[0], : a.shape[1]].set(a.astype(dtype))


def _pad_bias(b, f_pad):
    """Bias as a full (8, f_pad) f32 sublane tile; real values live in row 0."""
    b = b.reshape(-1).astype(jnp.float32)
    return jnp.zeros((8, f_pad), jnp.float32).at[0, : b.shape[0]].set(b)


# --------------------------------------------------------------------------
# Stage A: feature transform  t = x @ W1   (row-tiled, weights resident)
# --------------------------------------------------------------------------
def _transform_kernel(x_ref, w_ref, o_ref):
    o_ref[...] = jnp.dot(
        x_ref[...], w_ref[...], preferred_element_type=jnp.float32
    ).astype(o_ref.dtype)


def _transform(x, w, tile_m, out_dtype):
    n_pad, fin_p = x.shape
    f_out = w.shape[1]
    osz = jnp.dtype(out_dtype).itemsize
    est = 2 * (tile_m * fin_p * 4 + fin_p * f_out * 4 + tile_m * f_out * osz)
    return pl.pallas_call(
        _transform_kernel,
        out_shape=jax.ShapeDtypeStruct((n_pad, f_out), out_dtype),
        grid_spec=pltpu.PrefetchScalarGridSpec(
            num_scalar_prefetch=0,
            grid=(n_pad // tile_m,),
            in_specs=[
                pl.BlockSpec((tile_m, fin_p), lambda i: (i, 0)),
                pl.BlockSpec((fin_p, f_out), lambda i: (0, 0)),   # weights resident
            ],
            out_specs=pl.BlockSpec((tile_m, f_out), lambda i: (i, 0)),
        ),
        compiler_params=pltpu.CompilerParams(
            dimension_semantics=("parallel",),
            vmem_limit_bytes=_vmem_limit(est),
        ),
        cost_estimate=pl.CostEstimate(
            flops=2 * n_pad * fin_p * f_out,
            transcendentals=0,
            bytes_accessed=int(4 * (n_pad * fin_p + fin_p * f_out) + osz * n_pad * f_out),
        ),
    )(x, w)


# --------------------------------------------------------------------------
# Stage B: fused propagate + layer-2 transform
#   hw = relu(adj @ xw + b1) @ W2
# --------------------------------------------------------------------------
def _fused_prop_kernel(adj_ref, t_ref, b1_ref, w2_ref, o_ref, acc_ref, *,
                       tile_k, t_resident):
    k = pl.program_id(1)

    @pl.when(k == 0)
    def _():
        acc_ref[...] = jnp.zeros_like(acc_ref)

    if t_resident:
        start = pl.multiple_of(k * tile_k, tile_k)
        t_blk = t_ref[pl.ds(start, tile_k), :]
    else:
        t_blk = t_ref[...]

    acc_ref[...] += jnp.dot(adj_ref[...], t_blk, preferred_element_type=jnp.float32)

    @pl.when(k == pl.num_programs(1) - 1)
    def _():
        # Layer-1 bias + relu; eval-mode dropout is identity.
        # TODO(synk): a training-mode dropout mask would go here via
        # pltpu.prng_seed / pltpu.prng_random_bits.
        h = jnp.maximum(acc_ref[...] + b1_ref[0:1, :], 0.0)
        # Fused layer-2 feature transform (W2 resident): hw = h @ W2.
        # NOTE: padded rows (>= N) become relu(b1) @ W2 != 0; this is harmless
        # because adj's padded columns are zero and the wrapper slices [:N].
        o_ref[...] = jnp.dot(
            h, w2_ref[...], preferred_element_type=jnp.float32
        ).astype(o_ref.dtype)


def _propagate_fused(adj, t, b1, w2, tile_m, tile_k, t_resident, out_dtype):
    n_pad = adj.shape[0]
    fh = t.shape[1]
    fo = w2.shape[1]
    cs = jnp.dtype(adj.dtype).itemsize
    ts = jnp.dtype(t.dtype).itemsize
    osz = jnp.dtype(out_dtype).itemsize
    grid = (n_pad // tile_m, n_pad // tile_k)

    if t_resident:
        t_spec = pl.BlockSpec((n_pad, fh), lambda i, k: (0, 0))   # one HBM fetch total
        t_bytes = n_pad * fh * ts
        t_vmem = 2 * n_pad * fh * ts
    else:
        t_spec = pl.BlockSpec((tile_k, fh), lambda i, k: (k, 0))  # streamed fallback
        t_bytes = n_pad * fh * ts * grid[0]
        t_vmem = 2 * tile_k * fh * ts

    est = (2 * tile_m * tile_k * cs + t_vmem + 2 * 8 * fh * 4
           + 2 * fh * fo * 4 + 2 * tile_m * fo * osz + tile_m * fh * 4)

    kern = functools.partial(_fused_prop_kernel, tile_k=tile_k, t_resident=t_resident)
    return pl.pallas_call(
        kern,
        out_shape=jax.ShapeDtypeStruct((n_pad, fo), out_dtype),
        grid_spec=pltpu.PrefetchScalarGridSpec(
            num_scalar_prefetch=0,
            grid=grid,
            in_specs=[
                pl.BlockSpec((tile_m, tile_k), lambda i, k: (i, k)),
                t_spec,
                pl.BlockSpec((8, fh), lambda i, k: (0, 0)),        # bias resident
                pl.BlockSpec((fh, fo), lambda i, k: (0, 0)),       # W2 resident
            ],
            out_specs=pl.BlockSpec((tile_m, fo), lambda i, k: (i, 0)),
            scratch_shapes=[pltpu.VMEM((tile_m, fh), jnp.float32)],
        ),
        compiler_params=pltpu.CompilerParams(
            dimension_semantics=("parallel", "arbitrary"),
            vmem_limit_bytes=_vmem_limit(est),
        ),
        cost_estimate=pl.CostEstimate(
            flops=2 * n_pad * n_pad * fh + 2 * n_pad * fh * fo,
            transcendentals=0,
            bytes_accessed=int(cs * n_pad * n_pad + t_bytes + 4 * fh * fo
                               + osz * n_pad * fo),
        ),
    )(adj, t, b1, w2)


# --------------------------------------------------------------------------
# Stage C: final propagate  out = adj @ hw + b2  (accumulate in output block)
# --------------------------------------------------------------------------
def _final_prop_kernel(adj_ref, t_ref, b2_ref, o_ref, *, tile_k, t_resident):
    k = pl.program_id(1)

    @pl.when(k == 0)
    def _():
        o_ref[...] = jnp.zeros_like(o_ref)

    if t_resident:
        start = pl.multiple_of(k * tile_k, tile_k)
        t_blk = t_ref[pl.ds(start, tile_k), :]
    else:
        t_blk = t_ref[...]

    # Accumulate directly into the resident f32 output block (no scratch).
    o_ref[...] += jnp.dot(adj_ref[...], t_blk, preferred_element_type=jnp.float32)

    @pl.when(k == pl.num_programs(1) - 1)
    def _():
        o_ref[...] = o_ref[...] + b2_ref[0:1, :]


def _propagate_final(adj, t, b2, tile_m, tile_k, t_resident):
    n_pad = adj.shape[0]
    fo = t.shape[1]
    cs = jnp.dtype(adj.dtype).itemsize
    ts = jnp.dtype(t.dtype).itemsize
    grid = (n_pad // tile_m, n_pad // tile_k)

    if t_resident:
        t_spec = pl.BlockSpec((n_pad, fo), lambda i, k: (0, 0))
        t_bytes = n_pad * fo * ts
        t_vmem = 2 * n_pad * fo * ts
    else:
        t_spec = pl.BlockSpec((tile_k, fo), lambda i, k: (k, 0))
        t_bytes = n_pad * fo * ts * grid[0]
        t_vmem = 2 * tile_k * fo * ts

    est = 2 * tile_m * tile_k * cs + t_vmem + 2 * 8 * fo * 4 + 2 * tile_m * fo * 4

    kern = functools.partial(_final_prop_kernel, tile_k=tile_k, t_resident=t_resident)
    return pl.pallas_call(
        kern,
        out_shape=jax.ShapeDtypeStruct((n_pad, fo), jnp.float32),
        grid_spec=pltpu.PrefetchScalarGridSpec(
            num_scalar_prefetch=0,
            grid=grid,
            in_specs=[
                pl.BlockSpec((tile_m, tile_k), lambda i, k: (i, k)),
                t_spec,
                pl.BlockSpec((8, fo), lambda i, k: (0, 0)),        # bias resident
            ],
            out_specs=pl.BlockSpec((tile_m, fo), lambda i, k: (i, 0)),
        ),
        compiler_params=pltpu.CompilerParams(
            dimension_semantics=("parallel", "arbitrary"),
            vmem_limit_bytes=_vmem_limit(est),
        ),
        cost_estimate=pl.CostEstimate(
            flops=2 * n_pad * n_pad * fo,
            transcendentals=0,
            bytes_accessed=int(cs * n_pad * n_pad + t_bytes + 4 * n_pad * fo),
        ),
    )(adj, t, b2)


# --------------------------------------------------------------------------
# Full forward
# --------------------------------------------------------------------------
def simplified_gcn(x, adj, w1, b1, w2, b2, *, compute_dtype=jnp.float32):
    """x: [N,Fin], adj: [N,N], w1: [Fin,Fh], b1: [1,Fh], w2: [Fh,Fout], b2: [1,Fout].

    compute_dtype controls the dtype of adj / the transformed features fed to
    the bandwidth-bound propagation kernels (f32 default; bf16 halves adj HBM
    traffic, accumulation stays f32).
    """
    n, fin = x.shape
    fh = w1.shape[1]
    fout = w2.shape[1]

    n_pad = _round_up(n, LANE)
    fin_p = _round_up(fin, LANE)
    fh_p = _round_up(fh, LANE)
    fout_p = _round_up(fout, LANE)

    # Zero-padding keeps the math exact for the real rows/cols; already-aligned
    # arrays of the right dtype are passed through without an HBM copy.
    x_p = _pad_cast(x, (n_pad, fin_p), jnp.float32)
    adj_p = _pad_cast(adj, (n_pad, n_pad), compute_dtype)
    w1_p = _pad_cast(w1, (fin_p, fh_p), jnp.float32)
    w2_p = _pad_cast(w2, (fh_p, fout_p), jnp.float32)
    b1_p = _pad_bias(b1, fh_p)
    b2_p = _pad_bias(b2, fout_p)

    cs = jnp.dtype(compute_dtype).itemsize
    tile_m = _pick_tile_m(n_pad)
    tile_k = _pick_tile_k(n_pad, tile_m, cs)
    # Keep the transformed features VMEM-resident (fetched once) whenever a
    # double-buffered copy fits the budget; note on v7x each TensorCore holds
    # its own copy against a 64 MiB/TC physical (32 MiB default scoped) VMEM.
    t_resident = 2 * n_pad * max(fh_p, fout_p) * cs <= _RESIDENT_T_BUDGET

    # Layer 1 (re-associated, with fused layer-2 transform):
    #   xw = x @ W1 ; hw = relu(adj @ xw + b1) @ W2
    xw = _transform(x_p, w1_p, tile_m, compute_dtype)                     # [n_pad, fh_p]
    hw = _propagate_fused(adj_p, xw, b1_p, w2_p, tile_m, tile_k,
                          t_resident, compute_dtype)                      # [n_pad, fout_p]
    # Layer 2 (re-associated):  out = adj @ hw + b2
    out = _propagate_final(adj_p, hw, b2_p, tile_m, tile_k, t_resident)   # f32

    return out[:n, :fout]


if __name__ == "__main__":
    # Small, deterministic example shapes.
    N = 8                 # number of graph nodes
    in_channels = 32
    hidden_channels = 16
    out_channels = 8

    key = jax.random.PRNGKey(0)
    k_x, k_adj, k_w1, k_b1, k_w2, k_b2 = jax.random.split(key, 6)

    x = jax.random.normal(k_x, (N, in_channels), dtype=jnp.float32)
    a = jax.random.uniform(k_adj, (N, N), dtype=jnp.float32)
    adj = (a + a.T) * 0.5

    # nn.Linear weights are [out,in]; pass pre-transposed [in,out].
    w1 = jax.random.normal(k_w1, (in_channels, hidden_channels), jnp.float32) * 0.1
    b1 = jax.random.normal(k_b1, (1, hidden_channels), jnp.float32) * 0.1
    w2 = jax.random.normal(k_w2, (hidden_channels, out_channels), jnp.float32) * 0.1
    b2 = jax.random.normal(k_b2, (1, out_channels), jnp.float32) * 0.1

    # Pure-JAX reference (original association order; eval-mode dropout = identity).
    h = adj @ x
    h = jnp.maximum(h @ w1 + b1, 0.0)
    ref = (adj @ h) @ w2 + b2

    # f32 path: matches the PyTorch module numerics.
    out = simplified_gcn(x, adj, w1, b1, w2, b2)
    jax.block_until_ready(out)
    assert out.shape == (N, out_channels)
    assert jnp.allclose(out, ref, atol=1e-4, rtol=1e-4), float(jnp.max(jnp.abs(out - ref)))

    # bf16 propagate operands (halved adj HBM traffic); f32 accumulation keeps
    # numerics close — validated against the f32 reference with loose tolerance.
    out_bf16 = simplified_gcn(x, adj, w1, b1, w2, b2, compute_dtype=jnp.bfloat16)
    jax.block_until_ready(out_bf16)
    assert jnp.allclose(out_bf16, ref, atol=1e-1, rtol=1e-1), float(jnp.max(jnp.abs(out_bf16 - ref)))

    print("KERNEL_OK")
</pallas_src>

<mosaic_0001>
module attributes {stable_mosaic.version = 11 : i64} {
  func.func @_transform_kernel(%arg0: i32, %arg1: memref<128x128xf32, #tpu.memory_space<vmem>>, %arg2: memref<128x128xf32, #tpu.memory_space<vmem>>, %arg3: memref<128x128xf32, #tpu.memory_space<vmem>>) attributes {dimension_semantics = [#tpu.dimension_semantics<parallel>], iteration_bounds = array<i64: 1>, scalar_prefetch = 0 : i64, scratch_operands = 0 : i64, tpu.core_type = #tpu.core_type<tc>, window_params = [{transform_indices = @transform_0, window_bounds = array<i64: 128, 128>}, {pipeline_mode = #tpu.pipeline_mode<synchronous>, transform_indices = @transform_1, window_bounds = array<i64: 128, 128>}, {transform_indices = @transform_2, window_bounds = array<i64: 128, 128>}]} {
    %c0 = arith.constant 0 : index
    %c0_0 = arith.constant 0 : index
    %0 = vector.load %arg1[%c0, %c0_0] : memref<128x128xf32, #tpu.memory_space<vmem>>, vector<128x128xf32>
    %c0_1 = arith.constant 0 : index
    %c0_2 = arith.constant 0 : index
    %1 = vector.load %arg2[%c0_1, %c0_2] : memref<128x128xf32, #tpu.memory_space<vmem>>, vector<128x128xf32>
    %cst = arith.constant dense<0.000000e+00> : vector<128x128xf32>
    %2 = tpu.matmul %0, %1, %cst {dimension_numbers = #tpu.dot_dimension_numbers<[1], [0], [0], [1], [0, 0, 1, 1], [], []>} : vector<128x128xf32>, vector<128x128xf32>, vector<128x128xf32> -> vector<128x128xf32>
    %c0_3 = arith.constant 0 : index
    %c0_4 = arith.constant 0 : index
    %3 = vector.load %arg3[%c0_3, %c0_4] : memref<128x128xf32, #tpu.memory_space<vmem>>, vector<128x128xf32>
    tpu.vector_store %arg3[%c0_3, %c0_4], %2 {strides = array<i32>} : memref<128x128xf32, #tpu.memory_space<vmem>>, vector<128x128xf32>,
    return
  }
  func.func @transform_0(%arg0: i32) -> (i32, i32) {
    %c0_i32 = arith.constant 0 : i32
    %c0_i32_0 = arith.constant 0 : i32
    return %arg0, %c0_i32 : i32, i32
  }
  func.func @transform_1(%arg0: i32) -> (i32, i32) {
    %c0_i32 = arith.constant 0 : i32
    %c0_i32_0 = arith.constant 0 : i32
    %c0_i32_1 = arith.constant 0 : i32
    return %c0_i32, %c0_i32_0 : i32, i32
  }
  func.func @transform_2(%arg0: i32) -> (i32, i32) {
    %c0_i32 = arith.constant 0 : i32
    %c0_i32_0 = arith.constant 0 : i32
    return %arg0, %c0_i32 : i32, i32
  }
}

</mosaic_0001>

<llo_original>
// kernel: tpu_custom_call.1
$region0: #{tpu_custom_call.1}
  #allocation0 [shape = 'u32[]', space=smem, size = 0x4, offset = 0x4, fixed_abs, tag = 'smem constant byte address 0x4 - core index']
  #allocation1 [shape = 'u32[144,128]{1,0:T(1,128)}', space=vmem, size = 0x12000, scoped, tag = 'internal scratch']
  %s0 = inlined_call_operand.hbm [shape: f32[128,128], index: 0, kind: input, shape index: {}]
  %s1 = inlined_call_operand.hbm [shape: f32[128,128], index: 1, kind: input, shape index: {}]
  %s2 = inlined_call_operand.hbm [shape: f32[128,128], index: 2, kind: output, shape index: {}]
  %s3 = sld [smem:[#allocation0]]
  $region26: #{tpu_custom_call.1} parent=0
    _
  %s5 = ssub.s32 1, %s3
  %s6 = scalar_select 0, %s5, %s3
  $region1: #{tpu_custom_call.1} parent=0
    #allocation2 [shape = 'u8[65536]{0}', space=vmem, size = 0x10000, scoped, tag = 'input window, operand 0, single buffered']
    #allocation3 [shape = 's32[1]{0}', space=sflag, size = 0x4, scoped, tag = 'scoped memory for tpu_custom_call.1']
    #allocation4 [shape = 's32[1]{0}', space=sflag, size = 0x4, scoped, tag = 'scoped memory for tpu_custom_call.1']
    #allocation5 [shape = 'u8[65536]{0}', space=vmem, size = 0x10000, scoped, tag = 'input window, operand 1, single buffered']
    #allocation6 [shape = 's32[1]{0}', space=sflag, size = 0x4, scoped, tag = 'scoped memory for tpu_custom_call.1']
    #allocation7 [shape = 'u8[65536]{0}', space=vmem, size = 0x10000, scoped, tag = 'output window, operand 0, single buffered']
    %7 = vsyncpa [#allocation3], 0
    %8 = vsyncpa [#allocation6], 0
    %9 = vsyncpa [#allocation4], 0
    // Predicated region
    $region2: #{tpu_custom_call.1} parent=1 // pred_check
      _
    $region3: #{tpu_custom_call.1} parent=1 // pred_check_branch
      %11 = sbr.rel (0) target = $region5
    $region4: #{tpu_custom_call.1} parent=1 // pred_region
      %s13 = ssub.s32 2048, 2048
      %14 = vsyncadd [#allocation3], %s13
      %s15 = sshll.u32 [#allocation2], 4
      %s16 = int_to_ptr.vmem [resolvable:$true] %s15
      %21 = dma.hbm_to_vmem [thread:$0]  %s0, 2048, %s16, [#allocation3], 128, 128, 8
    $region5: #{tpu_custom_call.1} parent=1 // pred_fallthru
      _
    // Predicated region
    $region6: #{tpu_custom_call.1} parent=1 // pred_check
      _
    $region7: #{tpu_custom_call.1} parent=1 // pred_check_branch
      %23 = sbr.rel (0) target = $region9
    $region8: #{tpu_custom_call.1} parent=1 // pred_region
      %s25 = ssub.s32 2048, 2048
      %26 = vsyncadd [#allocation6], %s25
      %s27 = sshll.u32 [#allocation5], 4
      %s28 = int_to_ptr.vmem [resolvable:$true] %s27
      %33 = dma.hbm_to_vmem [thread:$0]  %s1, 2048, %s28, [#allocation6], 128, 128, 8
    $region9: #{tpu_custom_call.1} parent=1 // pred_fallthru
      _
    // Predicated region
    $region10: #{tpu_custom_call.1} parent=1 // pred_check
      _
    $region11: #{tpu_custom_call.1} parent=1 // pred_check_branch
      %35 = sbr.rel (0) target = $region13
    $region12: #{tpu_custom_call.1} parent=1 // pred_region
      %36 = dma.done [#allocation3], 2048
    $region13: #{tpu_custom_call.1} parent=1 // pred_fallthru
      _
    // Predicated region
    $region14: #{tpu_custom_call.1} parent=1 // pred_check
      _
    $region15: #{tpu_custom_call.1} parent=1 // pred_check_branch
      %38 = sbr.rel (0) target = $region17
    $region16: #{tpu_custom_call.1} parent=1 // pred_region
      %39 = dma.done [#allocation6], 2048
    $region17: #{tpu_custom_call.1} parent=1 // pred_fallthru
      _
    %v40 = vld [vmem:[#allocation2] sm:$0xff]
    %v41 = vld [vmem:[#allocation2 + $0x8] sm:$0xff]
    %v42 = vld [vmem:[#allocation2 + $0x10] sm:$0xff]
    %v43 = vld [vmem:[#allocation2 + $0x18] sm:$0xff]
    %v44 = vld [vmem:[#allocation2 + $0x20] sm:$0xff]
    %v45 = vld [vmem:[#allocation2 + $0x28] sm:$0xff]
    %v46 = vld [vmem:[#allocation2 + $0x30] sm:$0xff]
    %v47 = vld [vmem:[#allocation2 + $0x38] sm:$0xff]
    %v48 = vld [vmem:[#allocation2 + $0x40] sm:$0xff]
    %v49 = vld [vmem:[#allocation2 + $0x48] sm:$0xff]
    %v50 = vld [vmem:[#allocation2 + $0x50] sm:$0xff]
    %v51 = vld [vmem:[#allocation2 + $0x58] sm:$0xff]
    %v52 = vld [vmem:[#allocation2 + $0x60] sm:$0xff]
    %v53 = vld [vmem:[#allocation2 + $0x68] sm:$0xff]
    %v54 = vld [vmem:[#allocation2 + $0x70] sm:$0xff]
    %v55 = vld [vmem:[#allocation2 + $0x78] sm:$0xff]
    %v56 = vld [vmem:[#allocation5] sm:$0xff]
    %v57 = vld [vmem:[#allocation5 + $0x8] sm:$0xff]
    %v58 = vld [vmem:[#allocation5 + $0x10] sm:$0xff]
    %v59 = vld [vmem:[#allocation5 + $0x18] sm:$0xff]
    %v60 = vld [vmem:[#allocation5 + $0x20] sm:$0xff]
    %v61 = vld [vmem:[#allocation5 + $0x28] sm:$0xff]
    %v62 = vld [vmem:[#allocation5 + $0x30] sm:$0xff]
    %v63 = vld [vmem:[#allocation5 + $0x38] sm:$0xff]
    %v64 = vld [vmem:[#allocation5 + $0x40] sm:$0xff]
    %v65 = vld [vmem:[#allocation5 + $0x48] sm:$0xff]
    %v66 = vld [vmem:[#allocation5 + $0x50] sm:$0xff]
    %v67 = vld [vmem:[#allocation5 + $0x58] sm:$0xff]
    %v68 = vld [vmem:[#allocation5 + $0x60] sm:$0xff]
    %v69 = vld [vmem:[#allocation5 + $0x68] sm:$0xff]
    %v70 = vld [vmem:[#allocation5 + $0x70] sm:$0xff]
    %v71 = vld [vmem:[#allocation5 + $0x78] sm:$0xff]
    %72 = vmatprep.subr.mxu0 0.0
    %73 = vmatpush1.msra.mxu0 %v56
    %74 = vmatprep.subr.mxu0 0.0
    %75 = vmatpush1.msra.mxu0 %v57
    %76 = vmatprep.subr.mxu0 0.0
    %77 = vmatpush1.msra.mxu0 %v58
    %78 = vmatprep.subr.mxu0 0.0
    %79 = vmatpush1.msra.mxu0 %v59
    %80 = vmatprep.subr.mxu0 0.0
    %81 = vmatpush1.msra.mxu0 %v60
    %82 = vmatprep.subr.mxu0 0.0
    %83 = vmatpush1.msra.mxu0 %v61
    %84 = vmatprep.subr.mxu0 0.0
    %85 = vmatpush1.msra.mxu0 %v62
    %86 = vmatprep.subr.mxu0 0.0
    %87 = vmatpush1.msra.mxu0 %v63
    %88 = vmatprep.subr.mxu0 0.0
    %89 = vmatpush1.msra.mxu0 %v64
    %90 = vmatprep.subr.mxu0 0.0
    %91 = vmatpush1.msra.mxu0 %v65
    %92 = vmatprep.subr.mxu0 0.0
    %93 = vmatpush1.msra.mxu0 %v66
    %94 = vmatprep.subr.mxu0 0.0
    %95 = vmatpush1.msra.mxu0 %v67
    %96 = vmatprep.subr.mxu0 0.0
    %97 = vmatpush1.msra.mxu0 %v68
    %98 = vmatprep.subr.mxu0 0.0
    %99 = vmatpush1.msra.mxu0 %v69
    %100 = vmatprep.subr.mxu0 0.0
    %101 = vmatpush1.msra.mxu0 %v70
    %102 = vmatprep.subr.mxu0 0.0
    %103 = vmatpush1.msra.mxu0 %v71
    %104 = vmatprep.subr.mxu0 0.0
    %105 = vmatpush1.msra.mxu0 0.0
    %106 = vmatprep.subr.mxu0 0.0
    %107 = vmatpush1.msra.mxu0 0.0
    %108 = vmatprep.subr.mxu0 0.0
    %109 = vmatpush1.msra.mxu0 0.0
    %110 = vmatprep.subr.mxu0 0.0
    %111 = vmatpush1.msra.mxu0 0.0
    %112 = vmatprep.subr.mxu0 0.0
    %113 = vmatpush1.msra.mxu0 0.0
    %114 = vmatprep.subr.mxu0 0.0
    %115 = vmatpush1.msra.mxu0 0.0
    %116 = vmatprep.subr.mxu0 0.0
    %117 = vmatpush1.msra.mxu0 0.0
    %118 = vmatprep.subr.mxu0 0.0
    %119 = vmatpush1.msra.mxu0 0.0
    %120 = vmatprep.subr.mxu0 0.0
    %121 = vmatpush1.msra.mxu0 0.0
    %122 = vmatprep.subr.mxu0 0.0
    %123 = vmatpush1.msra.mxu0 0.0
    %124 = vmatprep.subr.mxu0 0.0
    %125 = vmatpush1.msra.mxu0 0.0
    %126 = vmatprep.subr.mxu0 0.0
    %127 = vmatpush1.msra.mxu0 0.0
    %128 = vmatprep.subr.mxu0 0.0
    %129 = vmatpush1.msra.mxu0 0.0
    %130 = vmatprep.subr.mxu0 0.0
    %131 = vmatpush1.msra.mxu0 0.0
    %132 = vmatprep.subr.mxu0 0.0
    %133 = vmatpush1.msra.mxu0 0.0
    %134 = vmatprep.subr.mxu0 0.0
    %135 = vmatpush1.msra.mxu0 0.0
    %136 = vmatprep.mubr.f32.mxu0 0.0
    %137 = vmatmul.mubr.f32.gmra.mrb[0].mxu0 %v40
    %v138 = vpop.f32.mrb[0].mxu0
    %v139 = vadd.f32 0.0, %v138
    %v140 = vpop.f32.mrb[0].mxu0
    %141 = vmatprep.mubr.f32.mxu0 0.0
    %142 = vmatmul.mubr.f32.gmra.mrb[0].mxu0 %v41
    %v143 = vpop.f32.mrb[0].mxu0
    %v144 = vadd.f32 0.0, %v143
    %v145 = vpop.f32.mrb[0].mxu0
    %146 = vmatprep.mubr.f32.mxu0 0.0
    %147 = vmatmul.mubr.f32.gmra.mrb[0].mxu0 %v42
    %v148 = vpop.f32.mrb[0].mxu0
    %v149 = vadd.f32 0.0, %v148
    %v150 = vpop.f32.mrb[0].mxu0
    %151 = vmatprep.mubr.f32.mxu0 0.0
    %152 = vmatmul.mubr.f32.gmra.mrb[0].mxu0 %v43
    %v153 = vpop.f32.mrb[0].mxu0
    %v154 = vadd.f32 0.0, %v153
    %v155 = vpop.f32.mrb[0].mxu0
    %156 = vmatprep.mubr.f32.mxu0 0.0
    %157 = vmatmul.mubr.f32.gmra.mrb[0].mxu0 %v44
    %v158 = vpop.f32.mrb[0].mxu0
    %v159 = vadd.f32 0.0, %v158
    %v160 = vpop.f32.mrb[0].mxu0
    %161 = vmatprep.mubr.f32.mxu0 0.0
    %162 = vmatmul.mubr.f32.gmra.mrb[0].mxu0 %v45
    %v163 = vpop.f32.mrb[0].mxu0
    %v164 = vadd.f32 0.0, %v163
    %v165 = vpop.f32.mrb[0].mxu0
    %166 = vmatprep.mubr.f32.mxu0 0.0
    %167 = vmatmul.mubr.f32.gmra.mrb[0].mxu0 %v46
    %v168 = vpop.f32.mrb[0].mxu0
    %v169 = vadd.f32 0.0, %v168
    %v170 = vpop.f32.mrb[0].mxu0
    %171 = vmatprep.mubr.f32.mxu0 0.0
    %172 = vmatmul.mubr.f32.gmra.mrb[0].mxu0 %v47
    %v173 = vpop.f32.mrb[0].mxu0
    %v174 = vadd.f32 0.0, %v173
    %v175 = vpop.f32.mrb[0].mxu0
    %176 = vmatprep.mubr.f32.mxu0 0.0
    %177 = vmatmul.mubr.f32.gmra.mrb[0].mxu0 %v48
    %v178 = vpop.f32.mrb[0].mxu0
    %v179 = vadd.f32 0.0, %v178
    %v180 = vpop.f32.mrb[0].mxu0
    %181 = vmatprep.mubr.f32.mxu0 0.0
    %182 = vmatmul.mubr.f32.gmra.mrb[0].mxu0 %v49
    %v183 = vpop.f32.mrb[0].mxu0
    %v184 = vadd.f32 0.0, %v183
    %v185 = vpop.f32.mrb[0].mxu0
    %186 = vmatprep.mubr.f32.mxu0 0.0
    %187 = vmatmul.mubr.f32.gmra.mrb[0].mxu0 %v50
    %v188 = vpop.f32.mrb[0].mxu0
    %v189 = vadd.f32 0.0, %v188
    %v190 = vpop.f32.mrb[0].mxu0
    %191 = vmatprep.mubr.f32.mxu0 0.0
    %192 = vmatmul.mubr.f32.gmra.mrb[0].mxu0 %v51
    %v193 = vpop.f32.mrb[0].mxu0
    %v194 = vadd.f32 0.0, %v193
    %v195 = vpop.f32.mrb[0].mxu0
    %196 = vmatprep.mubr.f32.mxu0 0.0
    %197 = vmatmul.mubr.f32.gmra.mrb[0].mxu0 %v52
    %v198 = vpop.f32.mrb[0].mxu0
    %v199 = vadd.f32 0.0, %v198
    %v200 = vpop.f32.mrb[0].mxu0
    %201 = vmatprep.mubr.f32.mxu0 0.0
    %202 = vmatmul.mubr.f32.gmra.mrb[0].mxu0 %v53
    %v203 = vpop.f32.mrb[0].mxu0
    %v204 = vadd.f32 0.0, %v203
    %v205 = vpop.f32.mrb[0].mxu0
    %206 = vmatprep.mubr.f32.mxu0 0.0
    %207 = vmatmul.mubr.f32.gmra.mrb[0].mxu0 %v54
    %v208 = vpop.f32.mrb[0].mxu0
    %v209 = vadd.f32 0.0, %v208
    %v210 = vpop.f32.mrb[0].mxu0
    %211 = vmatprep.mubr.f32.mxu0 0.0
    %212 = vmatmul.mubr.f32.gmra.mrb[0].mxu0 %v55
    %v213 = vpop.f32.mrb[0].mxu0
    %v214 = vadd.f32 0.0, %v213
    %v215 = vpop.f32.mrb[0].mxu0
    %216 = vdwg.mxu0
    %217 = vst [vmem:[#allocation7] sm:$0xff] %v139
    %218 = vst [vmem:[#allocation7 + $0x8] sm:$0xff] %v144
    %219 = vst [vmem:[#allocation7 + $0x10] sm:$0xff] %v149
    %220 = vst [vmem:[#allocation7 + $0x18] sm:$0xff] %v154
    %221 = vst [vmem:[#allocation7 + $0x20] sm:$0xff] %v159
    %222 = vst [vmem:[#allocation7 + $0x28] sm:$0xff] %v164
    %223 = vst [vmem:[#allocation7 + $0x30] sm:$0xff] %v169
    %224 = vst [vmem:[#allocation7 + $0x38] sm:$0xff] %v174
    %225 = vst [vmem:[#allocation7 + $0x40] sm:$0xff] %v179
    %226 = vst [vmem:[#allocation7 + $0x48] sm:$0xff] %v184
    %227 = vst [vmem:[#allocation7 + $0x50] sm:$0xff] %v189
    %228 = vst [vmem:[#allocation7 + $0x58] sm:$0xff] %v194
    %229 = vst [vmem:[#allocation7 + $0x60] sm:$0xff] %v199
    %230 = vst [vmem:[#allocation7 + $0x68] sm:$0xff] %v204
    %231 = vst [vmem:[#allocation7 + $0x70] sm:$0xff] %v209
    %232 = vst [vmem:[#allocation7 + $0x78] sm:$0xff] %v214
    // Predicated region
    $region18: #{tpu_custom_call.1} parent=1 // pred_check
      _
    $region19: #{tpu_custom_call.1} parent=1 // pred_check_branch
      %234 = sbr.rel (0) target = $region21
    $region20: #{tpu_custom_call.1} parent=1 // pred_region
      %s236 = ssub.s32 2048, 2048
      %237 = vsyncadd [#allocation4], %s236
      %s238 = sshll.u32 [#allocation7], 4
      %s239 = int_to_ptr.vmem [resolvable:$true] %s238
      %244 = dma.vmem_to_hbm [thread:$0]  %s239, 2048, %s2, [#allocation4], 128, 128, 8
    $region21: #{tpu_custom_call.1} parent=1 // pred_fallthru
      _
    // Predicated region
    $region22: #{tpu_custom_call.1} parent=1 // pred_check
      _
    $region23: #{tpu_custom_call.1} parent=1 // pred_check_branch
      %246 = sbr.rel (0) target = $region25
    $region24: #{tpu_custom_call.1} parent=1 // pred_region
      %247 = dma.done [#allocation4], 2048
    $region25: #{tpu_custom_call.1} parent=1 // pred_fallthru
      _
    %248 = vsyncpa [#allocation3], 1
    %249 = vsyncpa [#allocation6], 1
    %250 = vsyncpa [#allocation4], 1

</llo_original>
